<compile_context>
chip_gen: v6e
topology: v6e:2x2x1
jax: 0.10.0
libtpu: 0.0.40
codegen_flags: <defaults>
</compile_context>

<pallas_src>
import functools

import jax
import jax.numpy as jnp
from jax import lax
from jax.experimental import pallas as pl
from jax.experimental.pallas import tpu as pltpu


# Sequence lengths implied by Linear(5216, 256): 5216 = 32*13 + 32*150.
DRUG_LEN, DRUG_CH = 50, 62
PROT_LEN, PROT_CH = 598, 25


def _pool_dims(L):
    """Lengths after the two conv(k=2, pad=1) + maxpool(2, 2) stages."""
    assert L % 4 == 2, "tap layout assumes L % 4 == 2 (holds for L=50 and L=598)"
    p1 = (L + 1) // 2            # after stage 1
    p2 = (p1 + 1) // 2           # after stage 2
    p2p = ((p2 + 7) // 8) * 8    # padded to a sublane multiple for tile-aligned blocks
    return p1, p2, p2p


@functools.lru_cache(maxsize=None)
def _roll_down_shift_is_positive():
    """One-time self-check of the pltpu.roll rotation convention (cached).

    The kernel needs a shift toward *higher* row indices (row r receives row r-1,
    i.e. np.roll(x, 1, 0)).  Probe once, eagerly (warmed from prepare_params, which
    runs outside jit), so the conv kernel stays correct regardless of the Mosaic
    rotate convention.
    """
    def k(x_ref, o_ref):
        o_ref[...] = pltpu.roll(x_ref[...], 1, 0)

    x = jnp.arange(8 * 128, dtype=jnp.float32).reshape(8, 128)
    y = pl.pallas_call(k, out_shape=jax.ShapeDtypeStruct((8, 128), jnp.float32))(x)
    return bool(jnp.array_equal(y, jnp.roll(x, 1, 0)))


# ------------------------------ fused conv kernel --------------------------------

def _branch_block(u0, u1, u2, u3, u4, w1a, w1b, b1, w2a, w2b, b2, maskc):
    """Both Conv1d(k=2,s=1,pad=1)+ReLU+MaxPool(2,2) stages for one batch block.

    u0..u4 : (M, Cin) bf16, M = bblk*p2p; row b*p2p + q holds xpad[4q + k] of batch
             element b (xpad = zero-padded stage-1 input), so one conv position is
             two K=Cin matmuls against the per-tap weights.
    maskc  : (M, 1) f32; 1.0 on valid odd pooled rows (local q < p2-1), 0.0 on the
             phantom last odd row and on the time-padding rows.
    Returns the stage-2 output (M, 32) bf16, time-major within each batch element.
    """
    f32 = jnp.float32
    dot = functools.partial(jnp.dot, preferred_element_type=f32)

    # ---- stage 1: conv1 at positions 4q..4q+3; maxpool(relu(.)) == relu(max(.)+b).
    c0 = dot(u0, w1a) + dot(u1, w1b)          # conv1[4q]
    c1 = dot(u1, w1a) + dot(u2, w1b)          # conv1[4q+1]
    c2 = dot(u2, w1a) + dot(u3, w1b)          # conv1[4q+2]
    c3 = dot(u3, w1a) + dot(u4, w1b)          # conv1[4q+3]
    even1 = jnp.maximum(jnp.maximum(c0, c1) + b1, 0.0)   # out1[2q]
    odd1 = jnp.maximum(jnp.maximum(c2, c3) + b1, 0.0)    # out1[2q+1] (last row phantom)

    # ---- stage-2 taps at output row r:  xa=out1[2r-1], xb=out1[2r], xc=out1[2r+1].
    xc_f = odd1 * maskc                       # phantom / padded rows -> exactly 0
    # xa is xc shifted down by one row (XLU sublane rotate; replaces the old (p2,p2)
    # shift-matrix matmul).  The row wrapped in at the top of each batch element is
    # the previous element's last padded row, which maskc has already zeroed, so no
    # extra row-0 mask is needed.
    m = xc_f.shape[0]
    shift = 1 if _roll_down_shift_is_positive() else m - 1
    xa_f = pltpu.roll(xc_f, shift, 0)

    xa = xa_f.astype(jnp.bfloat16)
    xb = even1.astype(jnp.bfloat16)
    xc = xc_f.astype(jnp.bfloat16)

    # ---- stage 2 with w2 split per tap: no lane concatenation in the kernel.
    y2e = dot(xa, w2a) + dot(xb, w2b)         # conv2[2r]
    y2o = dot(xb, w2a) + dot(xc, w2b)         # conv2[2r+1]
    out = jnp.maximum(jnp.maximum(y2e, y2o) + b2, 0.0)
    return out.astype(jnp.bfloat16)


def fused_conv_kernel(ud0, ud1, ud2, ud3, ud4, up0, up1, up2, up3, up4,
                      wd1a, wd1b, bd1, wd2a, wd2b, bd2,
                      wp1a, wp1b, bp1, wp2a, wp2b, bp2,
                      mcd, mcp, od_ref, op_ref):
    od_ref[...] = _branch_block(ud0[...], ud1[...], ud2[...], ud3[...], ud4[...],
                                wd1a[...], wd1b[...], bd1[...],
                                wd2a[...], wd2b[...], bd2[...], mcd[...])
    op_ref[...] = _branch_block(up0[...], up1[...], up2[...], up3[...], up4[...],
                                wp1a[...], wp1b[...], bp1[...],
                                wp2a[...], wp2b[...], bp2[...], mcp[...])


def fused_conv(ud, up, weights, mcd, mcp, bblk, p2p_d, p2p_p):
    rows_d, cd = ud[0].shape
    rows_p, cp = up[0].shape
    nsteps = rows_d // (bblk * p2p_d)

    def rowspec(p2p, ncols):
        return pl.BlockSpec((bblk * p2p, ncols), lambda i: (i, 0))

    def whole(a):
        return pl.BlockSpec(a.shape, lambda i: (0, 0))

    in_specs = ([rowspec(p2p_d, cd)] * 5 + [rowspec(p2p_p, cp)] * 5
                + [whole(w) for w in weights]
                + [whole(mcd), whole(mcp)])
    out_specs = (rowspec(p2p_d, 32), rowspec(p2p_p, 32))
    out_shape = (jax.ShapeDtypeStruct((rows_d, 32), jnp.bfloat16),
                 jax.ShapeDtypeStruct((rows_p, 32), jnp.bfloat16))
    return pl.pallas_call(
        fused_conv_kernel,
        grid=(nsteps,),
        in_specs=in_specs,
        out_specs=out_specs,
        out_shape=out_shape,
        compiler_params=pltpu.CompilerParams(dimension_semantics=("parallel",)),
    )(*ud, *up, *weights, mcd, mcp)


# --------------------------------- MLP head --------------------------------------

def mlp_head_kernel(fd_ref, fp_ref, a1d_ref, a1p_ref, b1_ref, w2_ref, b2_ref, o_ref):
    h = jnp.dot(fd_ref[...], a1d_ref[...], preferred_element_type=jnp.float32)
    h = h + jnp.dot(fp_ref[...], a1p_ref[...], preferred_element_type=jnp.float32)
    h = jnp.maximum(h + b1_ref[...], 0.0)
    # TODO(synk): training-mode dropout (p=0.15) not implemented; identity at inference.
    o_ref[...] = jnp.sum(h * w2_ref[...], axis=1, keepdims=True) + b2_ref[...]


def mlp_head(fd, fp, a1d, a1p, hb1, w2, hb2, hblk):
    Bp = fd.shape[0]
    nsteps = Bp // hblk

    def rowspec(ncols):
        return pl.BlockSpec((hblk, ncols), lambda i: (i, 0))

    def whole(a):
        return pl.BlockSpec(a.shape, lambda i: (0, 0))

    return pl.pallas_call(
        mlp_head_kernel,
        grid=(nsteps,),
        in_specs=[rowspec(fd.shape[1]), rowspec(fp.shape[1]),
                  whole(a1d), whole(a1p), whole(hb1), whole(w2), whole(hb2)],
        out_specs=rowspec(1),
        out_shape=jax.ShapeDtypeStruct((Bp, 1), jnp.float32),
        compiler_params=pltpu.CompilerParams(dimension_semantics=("parallel",)),
    )(fd, fp, a1d, a1p, hb1, w2, hb2)


# ------------------------------ wrappers / glue -----------------------------------

def _conv_batch_block(B):
    # >= 2 grid steps whenever B >= 2 so "parallel" can shard across v7x's 2 cores;
    # cap at 16 elements/step (taps + temporaries stay a few MB of VMEM per step).
    if B <= 1:
        return 1
    return min(16, -(-B // 2))


def _head_batch_block(Bp):
    # Largest sublane-aligned block dividing the padded batch; otherwise one step.
    for cand in (32, 16, 8):
        if Bp % cand == 0:
            return cand
    return Bp


def _stage1_slices(x_ncl, p2, p2p):
    """Phase-split strided views of the zero-padded input, flattened over (batch,time).

    Returns 5 arrays u_k of shape (B*p2p, Cin) bf16 with row b*p2p + q = xpad[b, 4q+k];
    all strided slicing lives here in XLA so the kernel only does dense, aligned reads.
    """
    B, C, L = x_ncl.shape
    xt = jnp.transpose(x_ncl, (0, 2, 1))                # (B, L, C)
    # One leading zero (conv padding), one real trailing zero (conv padding) and one
    # dummy trailing zero that only feeds the masked phantom row.
    xp = jnp.pad(xt, ((0, 0), (1, 2), (0, 0)))
    us = []
    for k in range(5):
        uk = xp[:, k:k + 4 * (p2 - 1) + 1:4, :]          # (B, p2, C)
        uk = jnp.pad(uk, ((0, 0), (0, p2p - p2), (0, 0)))
        us.append(uk.reshape(B * p2p, C).astype(jnp.bfloat16))
    return us


def _odd_row_mask(p2, p2p, bblk):
    """(bblk*p2p, 1) f32: 1.0 on valid odd pooled rows, 0.0 on the phantom last odd
    row and the time-padding rows.  Constant-folded by XLA under jit."""
    base = (jnp.arange(p2p) < (p2 - 1)).astype(jnp.float32).reshape(p2p, 1)
    return jnp.tile(base, (bblk, 1))


def prepare_params(params):
    """One-time conversion of PyTorch-layout parameters into kernel layouts.

    Runs OUTSIDE the hot path: conv weights are split per tap and cast to bf16; lw1 is
    transposed, its rows permuted to the kernel's time-major padded feature order (so
    the conv->head handoff needs no XLA transpose) with zero rows at padded time
    positions, and stored as bf16 so the dominant weight streams at half the HBM bytes.
    """
    _roll_down_shift_is_positive()   # warm the roll-convention probe outside jit
    f32, bf16 = jnp.float32, jnp.bfloat16
    _, p2_d, p2p_d = _pool_dims(DRUG_LEN)
    _, p2_p, p2p_p = _pool_dims(PROT_LEN)

    def conv_split(w, b):
        w = jnp.asarray(w)
        return (w[:, :, 0].T.astype(bf16), w[:, :, 1].T.astype(bf16),
                jnp.asarray(b).reshape(1, -1).astype(f32))

    wd1a, wd1b, bd1 = conv_split(params['sw1'], params['sb1'])
    wd2a, wd2b, bd2 = conv_split(params['sw2'], params['sb2'])
    wp1a, wp1b, bp1 = conv_split(params['pw1'], params['pb1'])
    wp2a, wp2b, bp2 = conv_split(params['pw2'], params['pb2'])

    a1 = jnp.asarray(params['lw1']).T.astype(f32)        # (5216, 256)

    def expand(a_part, p2, p2p):
        # PyTorch flattens channel-major (c*p2 + t); the kernel emits time-major
        # (t*32 + c) with p2 padded to p2p -> permute + zero-pad the rows here, once.
        a3 = a_part.reshape(32, p2, 256).transpose(1, 0, 2)      # (p2, 32, 256)
        a3 = jnp.pad(a3, ((0, p2p - p2), (0, 0), (0, 0)))
        return a3.reshape(p2p * 32, 256).astype(bf16)

    nd = 32 * p2_d
    return {
        'conv_weights': (wd1a, wd1b, bd1, wd2a, wd2b, bd2,
                         wp1a, wp1b, bp1, wp2a, wp2b, bp2),
        'a1d': expand(a1[:nd], p2_d, p2p_d),              # (512, 256)  bf16
        'a1p': expand(a1[nd:], p2_p, p2p_p),              # (4864, 256) bf16
        'hb1': jnp.asarray(params['lb1']).reshape(1, -1).astype(f32),
        'w2': jnp.asarray(params['lw2']).reshape(1, -1).astype(f32),
        'hb2': jnp.asarray(params['lb2']).reshape(1, 1).astype(f32),
    }


@jax.jit
def cnncom_forward(x, x1, kp):
    assert x.shape[1:] == (DRUG_CH, DRUG_LEN) and x1.shape[1:] == (PROT_CH, PROT_LEN)
    B = x.shape[0]
    _, p2_d, p2p_d = _pool_dims(DRUG_LEN)
    _, p2_p, p2p_p = _pool_dims(PROT_LEN)

    bblk = _conv_batch_block(B)
    Bp = -(-B // bblk) * bblk
    if Bp != B:                                 # pad batch to a whole number of blocks
        x = jnp.pad(x, ((0, Bp - B), (0, 0), (0, 0)))
        x1 = jnp.pad(x1, ((0, Bp - B), (0, 0), (0, 0)))

    ud = _stage1_slices(x, p2_d, p2p_d)         # drug branch:    Conv1d(62->16), Conv1d(16->32)
    up = _stage1_slices(x1, p2_p, p2p_p)        # protein branch: Conv1d(25->16), Conv1d(16->32)
    mcd = _odd_row_mask(p2_d, p2p_d, bblk)
    mcp = _odd_row_mask(p2_p, p2p_p, bblk)
    od, op = fused_conv(ud, up, kp['conv_weights'], mcd, mcp, bblk, p2p_d, p2p_p)

    # Kernel outputs are (Bp*p2p, 32) time-major -> the per-element flatten is a free
    # row-major reshape (no XLA transpose / concat); lw1 was row-permuted to match.
    fd = od.reshape(Bp, 32 * p2p_d)
    fp = op.reshape(Bp, 32 * p2p_p)
    hblk = _head_batch_block(Bp)
    out = mlp_head(fd, fp, kp['a1d'], kp['a1p'], kp['hb1'], kp['w2'], kp['hb2'], hblk)
    return out[:B]


# ---------------- pure-JAX reference (for correctness check only) ----------------

def cnncom_reference(x, x1, params):
    def conv1d(v, w, b):
        y = lax.conv_general_dilated(v, w, window_strides=(1,), padding=[(1, 1)],
                                     dimension_numbers=('NCH', 'OIH', 'NCH'))
        return y + b[None, :, None]

    def pool(v):
        return lax.reduce_window(v, -jnp.inf, lax.max, (1, 1, 2), (1, 1, 2), 'VALID')

    a = pool(jax.nn.relu(conv1d(x, params['sw1'], params['sb1'])))
    a = pool(jax.nn.relu(conv1d(a, params['sw2'], params['sb2'])))
    b_ = pool(jax.nn.relu(conv1d(x1, params['pw1'], params['pb1'])))
    b_ = pool(jax.nn.relu(conv1d(b_, params['pw2'], params['pb2'])))
    f = jnp.concatenate([a.reshape(a.shape[0], -1), b_.reshape(b_.shape[0], -1)], axis=1)
    h = jax.nn.relu(f @ params['lw1'].T + params['lb1'])
    return h @ params['lw2'].T + params['lb2']


def init_params(key):
    ks = jax.random.split(key, 12)
    s = 0.05
    f32 = jnp.float32
    return {
        'sw1': jax.random.normal(ks[0], (16, 62, 2), f32) * s,   # Conv1d(62, 16, 2)
        'sb1': jax.random.normal(ks[1], (16,), f32) * s,
        'sw2': jax.random.normal(ks[2], (32, 16, 2), f32) * s,   # Conv1d(16, 32, 2)
        'sb2': jax.random.normal(ks[3], (32,), f32) * s,
        'pw1': jax.random.normal(ks[4], (16, 25, 2), f32) * s,   # Conv1d(25, 16, 2)
        'pb1': jax.random.normal(ks[5], (16,), f32) * s,
        'pw2': jax.random.normal(ks[6], (32, 16, 2), f32) * s,   # Conv1d(16, 32, 2)
        'pb2': jax.random.normal(ks[7], (32,), f32) * s,
        'lw1': jax.random.normal(ks[8], (256, 5216), f32) * s,   # Linear(5216, 256)
        'lb1': jax.random.normal(ks[9], (256,), f32) * s,
        'lw2': jax.random.normal(ks[10], (1, 256), f32) * s,     # Linear(256, 1)
        'lb2': jax.random.normal(ks[11], (1,), f32) * s,
    }


if __name__ == "__main__":
    key = jax.random.PRNGKey(0)
    kx, kx1, kpk = jax.random.split(key, 3)
    # Shapes implied by the forward pass: drug length 50 -> 13 after two
    # conv(k=2, pad=1)+pool(2,2) stages; protein length 598 -> 150, so the
    # concatenated feature vector is 13*32 + 150*32 = 5216 as Linear(5216, 256) expects.
    x = jax.random.normal(kx, (2, DRUG_CH, DRUG_LEN), jnp.float32)
    x1 = jax.random.normal(kx1, (2, PROT_CH, PROT_LEN), jnp.float32)
    params = init_params(kpk)
    kparams = prepare_params(params)                     # one-time, outside jit

    out = jax.block_until_ready(cnncom_forward(x, x1, kparams))
    ref = jax.block_until_ready(cnncom_reference(x, x1, params))
    assert out.shape == (2, 1), out.shape
    # bf16 streaming of taps / conv weights / features / lw1 keeps the error at the
    # few-1e-3 level against the f32 reference; assert with comfortable margin.
    assert jnp.allclose(out, ref, rtol=3e-2, atol=3e-2), (out, ref)
    print("KERNEL_OK")
</pallas_src>

<mosaic_0001>
module attributes {stable_mosaic.version = 11 : i64} {
  func.func @k(%arg0: memref<8x128xf32, #tpu.memory_space<vmem>>, %arg1: memref<8x128xf32, #tpu.memory_space<vmem>>) attributes {dimension_semantics = [], scalar_prefetch = 0 : i64, scratch_operands = 0 : i64, tpu.core_type = #tpu.core_type<tc>} {
    %c0 = arith.constant 0 : index
    %c0_0 = arith.constant 0 : index
    %0 = vector.load %arg0[%c0, %c0_0] : memref<8x128xf32, #tpu.memory_space<vmem>>, vector<8x128xf32>
    %c1_i32 = arith.constant 1 : i32
    %1 = tpu.dynamic_rotate %0 by %c1_i32 dim 0 : vector<8x128xf32>, i32 -> vector<8x128xf32>
    %c0_1 = arith.constant 0 : index
    %c0_2 = arith.constant 0 : index
    %2 = vector.load %arg1[%c0_1, %c0_2] : memref<8x128xf32, #tpu.memory_space<vmem>>, vector<8x128xf32>
    tpu.vector_store %arg1[%c0_1, %c0_2], %1 {strides = array<i32>} : memref<8x128xf32, #tpu.memory_space<vmem>>, vector<8x128xf32>,
    return
  }
}

</mosaic_0001>

<llo_original>
// kernel: tpu_custom_call.1
$region0: #{tpu_custom_call.1}
  #allocation0 [shape = 'u32[]', space=smem, size = 0x4, offset = 0x4, fixed_abs, tag = 'smem constant byte address 0x4 - core index']
  #allocation1 [shape = 'u32[144,128]{1,0:T(1,128)}', space=vmem, size = 0x12000, scoped, tag = 'internal scratch']
  %s0 = inlined_call_operand.hbm [shape: f32[8,128], index: 0, kind: input, shape index: {}]
  %s1 = inlined_call_operand.hbm [shape: f32[8,128], index: 1, kind: output, shape index: {}]
  %s2 = sld [smem:[#allocation0]]
  $region18: #{tpu_custom_call.1} parent=0
    _
  %s4 = ssub.s32 1, %s2
  %s5 = scalar_select 0, %s4, %s2
  $region1: #{tpu_custom_call.1} parent=0
    #allocation2 [shape = 'u8[4096]{0}', space=vmem, size = 0x1000, scoped, tag = 'input window, operand 0, single buffered']
    #allocation3 [shape = 's32[1]{0}', space=sflag, size = 0x4, scoped, tag = 'scoped memory for tpu_custom_call.1']
    #allocation4 [shape = 's32[1]{0}', space=sflag, size = 0x4, scoped, tag = 'scoped memory for tpu_custom_call.1']
    #allocation5 [shape = 'u8[4096]{0}', space=vmem, size = 0x1000, scoped, tag = 'output window, operand 0, single buffered']
    %6 = vsyncpa [#allocation3], 0
    %7 = vsyncpa [#allocation4], 0
    // Predicated region
    $region2: #{tpu_custom_call.1} parent=1 // pred_check
      _
    $region3: #{tpu_custom_call.1} parent=1 // pred_check_branch
      %9 = sbr.rel (0) target = $region5
    $region4: #{tpu_custom_call.1} parent=1 // pred_region
      %s11 = ssub.s32 128, 128
      %12 = vsyncadd [#allocation3], %s11
      %s14 = sshll.u32 [#allocation2], 4
      %s15 = int_to_ptr.vmem [resolvable:$true] %s14
      %17 = dma.hbm_to_vmem [thread:$0]  %s0, 128, %s15, [#allocation3]
    $region5: #{tpu_custom_call.1} parent=1 // pred_fallthru
      _
    // Predicated region
    $region6: #{tpu_custom_call.1} parent=1 // pred_check
      _
    $region7: #{tpu_custom_call.1} parent=1 // pred_check_branch
      %19 = sbr.rel (0) target = $region9
    $region8: #{tpu_custom_call.1} parent=1 // pred_region
      %20 = dma.done [#allocation3], 128
    $region9: #{tpu_custom_call.1} parent=1 // pred_fallthru
      _
    %v21 = vld [vmem:[#allocation2] sm:$0xff]
    %v22 = vrot.slane %v21, 7
    %23 = vst [vmem:[#allocation5] sm:$0xff] %v22
    // Predicated region
    $region10: #{tpu_custom_call.1} parent=1 // pred_check
      _
    $region11: #{tpu_custom_call.1} parent=1 // pred_check_branch
      %25 = sbr.rel (0) target = $region13
    $region12: #{tpu_custom_call.1} parent=1 // pred_region
      %s27 = ssub.s32 128, 128
      %28 = vsyncadd [#allocation4], %s27
      %s30 = sshll.u32 [#allocation5], 4
      %s31 = int_to_ptr.vmem [resolvable:$true] %s30
      %33 = dma.vmem_to_hbm [thread:$0]  %s31, 128, %s1, [#allocation4]
    $region13: #{tpu_custom_call.1} parent=1 // pred_fallthru
      _
    // Predicated region
    $region14: #{tpu_custom_call.1} parent=1 // pred_check
      _
    $region15: #{tpu_custom_call.1} parent=1 // pred_check_branch
      %35 = sbr.rel (0) target = $region17
    $region16: #{tpu_custom_call.1} parent=1 // pred_region
      %36 = dma.done [#allocation4], 128
    $region17: #{tpu_custom_call.1} parent=1 // pred_fallthru
      _
    %37 = vsyncpa [#allocation3], 1
    %38 = vsyncpa [#allocation4], 1

</llo_original>
